<compile_context>
chip_gen: v5e
topology: v5e:2x2
jax: 0.10.0
libtpu: 0.0.40
codegen_flags: <defaults>
</compile_context>

<pallas_src>
import functools

import jax
import jax.numpy as jnp
from jax.experimental import pallas as pl
from jax.experimental.pallas import tpu as pltpu


_LANE = 128      # vreg lane width; batch tile is a multiple of this
_SUBLANE = 8     # f32 sublane granularity; output rows padded to this


def _round_up(n: int, m: int) -> int:
    return (n + m - 1) // m * m


def _forecast_mlp_kernel(xt_ref, w1t_ref, b1_ref, w2t_ref, b2_ref, ot_ref):
    """One batch tile (transposed): o^T = W2^T_pad @ relu(W1^T @ x^T + b1) + b2."""
    xt = xt_ref[...]                                        # [F, TM]  (VMEM)
    h = jnp.dot(w1t_ref[...], xt,
                preferred_element_type=jnp.float32)         # [H, TM]  (MXU)
    h = jnp.maximum(h + b1_ref[...], 0.0)                   # bias+ReLU (VPU)
    y = jnp.dot(w2t_ref[...], h,
                preferred_element_type=jnp.float32)         # [8, TM]  (MXU)
    # b2 is a scalar held in SMEM; only row 0 of the 8-row slab is kept by
    # the wrapper, so adding it everywhere is fine.
    ot_ref[...] = (y + b2_ref[0, 0]).astype(ot_ref.dtype)


@functools.partial(jax.jit, static_argnames=("tm",))
def forecast_model_forward(x, w1, b1, w2, b2, *, tm=512):
    """ForecastModel.forward(x) == inner_model(x); inner model = MLP head."""
    B, F = x.shape
    H = w1.shape[1]
    n_out = w2.shape[1]
    assert n_out == 1, "forecasting head emits one scalar per window"
    assert n_out <= _SUBLANE

    # Batch tile: >= 512 lanes when the batch is large (best measured HBM
    # utilisation); otherwise one lane-aligned tile covering the batch.
    TM = tm if B >= tm else _round_up(B, _LANE)
    B_pad = _round_up(B, TM)

    # Transposed, zero-padded activations: batch -> lane dimension.
    xt = x.astype(jnp.float32).T                            # [F, B]
    if B_pad != B:
        xt = jnp.pad(xt, ((0, 0), (0, B_pad - B)))          # [F, B_pad]

    w1t = w1.astype(jnp.float32).T                          # [H, F]
    b1_col = b1.astype(jnp.float32).reshape(H, 1)           # [H, 1]
    # Output rows padded sublane-wise: W2^T -> [8, H], rows 1..7 are zero.
    w2t_pad = jnp.zeros((_SUBLANE, H), jnp.float32).at[:n_out, :].set(
        w2.astype(jnp.float32).T)
    b2_sc = b2.reshape(1, 1).astype(jnp.float32)

    grid = (B_pad // TM,)

    flops = 2 * B_pad * (F * H + H * _SUBLANE)
    bytes_accessed = 4 * (F * B_pad + H * F + H + _SUBLANE * H + 1
                          + _SUBLANE * B_pad)

    out_t = pl.pallas_call(
        _forecast_mlp_kernel,
        out_shape=jax.ShapeDtypeStruct((_SUBLANE, B_pad), jnp.float32),
        grid_spec=pltpu.PrefetchScalarGridSpec(
            num_scalar_prefetch=0,
            grid=grid,
            in_specs=[
                # x^T: streamed tile-by-tile along lanes (double-buffered DMA).
                pl.BlockSpec((F, TM), lambda i: (0, i)),
                # Weights / biases: resident in VMEM across all grid steps.
                pl.BlockSpec((H, F), lambda i: (0, 0)),
                pl.BlockSpec((H, 1), lambda i: (0, 0)),
                pl.BlockSpec((_SUBLANE, H), lambda i: (0, 0)),
                # b2 scalar lives in SMEM.
                pl.BlockSpec((1, 1), lambda i: (0, 0),
                             memory_space=pltpu.MemorySpace.SMEM),
            ],
            out_specs=pl.BlockSpec((_SUBLANE, TM), lambda i: (0, i)),
        ),
        compiler_params=pltpu.CompilerParams(
            dimension_semantics=("parallel",),      # megacore split on v7x
            vmem_limit_bytes=32 * 1024 * 1024,      # headroom on v5e/v6e/v7x
        ),
        cost_estimate=pl.CostEstimate(
            flops=flops, transcendentals=0, bytes_accessed=bytes_accessed),
    )(xt, w1t, b1_col, w2t_pad, b2_sc)

    # Row 0 holds the real forecasts; drop sublane + batch padding.
    return out_t[:n_out, :B].T


def _reference_forward(x, w1, b1, w2, b2):
    h = jnp.maximum(x @ w1 + b1, 0.0)
    return h @ w2 + b2


if __name__ == "__main__":
    # Small shapes consistent with a forecasting model:
    #   batch=8 windows, each window = seq_len(8) * d_feat(4) = 32 features,
    #   hidden=64, one scalar forecast per window.
    batch, features, hidden, n_out = 8, 32, 64, 1

    key = jax.random.PRNGKey(0)
    kx, k1, k2, k3, k4, kx2 = jax.random.split(key, 6)

    x = jax.random.normal(kx, (batch, features), dtype=jnp.float32)

    # Deterministic parameter init (PyTorch-Linear-style uniform bounds).
    lim1 = 1.0 / (features ** 0.5)
    lim2 = 1.0 / (hidden ** 0.5)
    w1 = jax.random.uniform(k1, (features, hidden), jnp.float32, -lim1, lim1)
    b1 = jax.random.uniform(k2, (1, hidden), jnp.float32, -lim1, lim1)
    w2 = jax.random.uniform(k3, (hidden, n_out), jnp.float32, -lim2, lim2)
    b2 = jax.random.uniform(k4, (1, n_out), jnp.float32, -lim2, lim2)

    # Single-tile path (toy batch, padded up to 128 lanes).
    out = forecast_model_forward(x, w1, b1, w2, b2)
    out = jax.block_until_ready(out)
    ref = _reference_forward(x, w1, b1, w2, b2)
    assert out.shape == (batch, n_out)
    assert jnp.allclose(out, ref, atol=1e-5, rtol=1e-5)

    # Multi-tile path: exercises the batch grid, resident weights, and the
    # zero-pad tail handling (1000 rows -> 2 tiles of TM=512).
    big_batch = 1000
    x_big = jax.random.normal(kx2, (big_batch, features), dtype=jnp.float32)
    out_big = forecast_model_forward(x_big, w1, b1, w2, b2)
    out_big = jax.block_until_ready(out_big)
    ref_big = _reference_forward(x_big, w1, b1, w2, b2)
    assert out_big.shape == (big_batch, n_out)
    assert jnp.allclose(out_big, ref_big, atol=1e-4, rtol=1e-4)

    print("KERNEL_OK")
</pallas_src>

<mosaic_0001>
module attributes {stable_mosaic.version = 11 : i64} {
  func.func @_forecast_mlp_kernel(%arg0: i32, %arg1: memref<32x128xf32, #tpu.memory_space<vmem>>, %arg2: memref<64x32xf32, #tpu.memory_space<vmem>>, %arg3: memref<64x1xf32, #tpu.memory_space<vmem>>, %arg4: memref<8x64xf32, #tpu.memory_space<vmem>>, %arg5: memref<1x1xf32, #tpu.memory_space<smem>>, %arg6: memref<8x128xf32, #tpu.memory_space<vmem>>) attributes {dimension_semantics = [#tpu.dimension_semantics<parallel>], iteration_bounds = array<i64: 1>, scalar_prefetch = 0 : i64, scratch_operands = 0 : i64, tpu.core_type = #tpu.core_type<tc>, window_params = [{transform_indices = @transform_0, window_bounds = array<i64: 32, 128>}, {pipeline_mode = #tpu.pipeline_mode<synchronous>, transform_indices = @transform_1, window_bounds = array<i64: 64, 32>}, {pipeline_mode = #tpu.pipeline_mode<synchronous>, transform_indices = @transform_2, window_bounds = array<i64: 64, 1>}, {pipeline_mode = #tpu.pipeline_mode<synchronous>, transform_indices = @transform_3, window_bounds = array<i64: 8, 64>}, {transform_indices = @transform_4, window_bounds = array<i64: 1, 1>}, {transform_indices = @transform_5, window_bounds = array<i64: 8, 128>}]} {
    %c0 = arith.constant 0 : index
    %c0_0 = arith.constant 0 : index
    %0 = vector.load %arg1[%c0, %c0_0] : memref<32x128xf32, #tpu.memory_space<vmem>>, vector<32x128xf32>
    %c0_1 = arith.constant 0 : index
    %c0_2 = arith.constant 0 : index
    %1 = vector.load %arg2[%c0_1, %c0_2] : memref<64x32xf32, #tpu.memory_space<vmem>>, vector<64x32xf32>
    %cst = arith.constant dense<0.000000e+00> : vector<64x128xf32>
    %2 = tpu.matmul %1, %0, %cst {dimension_numbers = #tpu.dot_dimension_numbers<[1], [0], [0], [1], [0, 0, 1, 1], [], []>} : vector<64x32xf32>, vector<32x128xf32>, vector<64x128xf32> -> vector<64x128xf32>
    %c0_3 = arith.constant 0 : index
    %c0_4 = arith.constant 0 : index
    %3 = vector.load %arg3[%c0_3, %c0_4] : memref<64x1xf32, #tpu.memory_space<vmem>>, vector<64x1xf32>
    %4 = vector.broadcast %3 : vector<64x1xf32> to vector<64x128xf32>
    %5 = arith.addf %2, %4 : vector<64x128xf32>
    %cst_5 = arith.constant 0.000000e+00 : f32
    %6 = vector.broadcast %cst_5 : f32 to vector<64x128xf32>
    %7 = arith.maximumf %5, %6 : vector<64x128xf32>
    %c0_6 = arith.constant 0 : index
    %c0_7 = arith.constant 0 : index
    %8 = vector.load %arg4[%c0_6, %c0_7] : memref<8x64xf32, #tpu.memory_space<vmem>>, vector<8x64xf32>
    %cst_8 = arith.constant dense<0.000000e+00> : vector<8x128xf32>
    %9 = tpu.matmul %8, %7, %cst_8 {dimension_numbers = #tpu.dot_dimension_numbers<[1], [0], [0], [1], [0, 0, 1, 1], [], []>} : vector<8x64xf32>, vector<64x128xf32>, vector<8x128xf32> -> vector<8x128xf32>
    %c0_9 = arith.constant 0 : index
    %c0_10 = arith.constant 0 : index
    %10 = memref.load %arg5[%c0_9, %c0_10] : memref<1x1xf32, #tpu.memory_space<smem>>
    %11 = vector.broadcast %10 : f32 to vector<8x128xf32>
    %12 = arith.addf %9, %11 : vector<8x128xf32>
    %c0_11 = arith.constant 0 : index
    %c0_12 = arith.constant 0 : index
    %13 = vector.load %arg6[%c0_11, %c0_12] : memref<8x128xf32, #tpu.memory_space<vmem>>, vector<8x128xf32>
    tpu.vector_store %arg6[%c0_11, %c0_12], %12 {strides = array<i32>} : memref<8x128xf32, #tpu.memory_space<vmem>>, vector<8x128xf32>,
    return
  }
  func.func @transform_0(%arg0: i32) -> (i32, i32) {
    %c0_i32 = arith.constant 0 : i32
    %c0_i32_0 = arith.constant 0 : i32
    return %c0_i32, %arg0 : i32, i32
  }
  func.func @transform_1(%arg0: i32) -> (i32, i32) {
    %c0_i32 = arith.constant 0 : i32
    %c0_i32_0 = arith.constant 0 : i32
    %c0_i32_1 = arith.constant 0 : i32
    return %c0_i32, %c0_i32_0 : i32, i32
  }
  func.func @transform_2(%arg0: i32) -> (i32, i32) {
    %c0_i32 = arith.constant 0 : i32
    %c0_i32_0 = arith.constant 0 : i32
    %c0_i32_1 = arith.constant 0 : i32
    return %c0_i32, %c0_i32_0 : i32, i32
  }
  func.func @transform_3(%arg0: i32) -> (i32, i32) {
    %c0_i32 = arith.constant 0 : i32
    %c0_i32_0 = arith.constant 0 : i32
    %c0_i32_1 = arith.constant 0 : i32
    return %c0_i32, %c0_i32_0 : i32, i32
  }
  func.func @transform_4(%arg0: i32) -> (i32, i32) {
    %c0_i32 = arith.constant 0 : i32
    %c0_i32_0 = arith.constant 0 : i32
    %c0_i32_1 = arith.constant 0 : i32
    return %c0_i32, %c0_i32_0 : i32, i32
  }
  func.func @transform_5(%arg0: i32) -> (i32, i32) {
    %c0_i32 = arith.constant 0 : i32
    %c0_i32_0 = arith.constant 0 : i32
    return %c0_i32, %arg0 : i32, i32
  }
}

</mosaic_0001>

<llo_original>
// kernel: forecast_model_forward.1
$region0: #{forecast_model_forward.1}
  #allocation0 [shape = 'u32[]', space=smem, size = 0x4, offset = 0x4, fixed_abs, tag = 'smem constant byte address 0x4 - core index']
  #allocation1 [shape = 'u32[72,128]{1,0:T(1,128)}', space=vmem, size = 0x9000, scoped, tag = 'internal scratch']
  #allocation2 [shape = 'f32[1,1]{1,0:T(1,128)S(6)}', space=smem, size = 0x200, scoped, tag = 'scoped memory for forecast_model_forward.1']
  %s0 = inlined_call_operand.vmem [shape: f32[32,128], index: 0, kind: input, shape index: {}]
  %s1 = inlined_call_operand.vmem [shape: f32[64,32], index: 1, kind: input, shape index: {}]
  %s2 = inlined_call_operand.vmem [shape: f32[64,1], index: 2, kind: input, shape index: {}]
  %s3 = inlined_call_operand.vmem [shape: f32[8,64], index: 3, kind: input, shape index: {}]
  %s4 = inlined_call_operand.<no memory space> [shape: f32[1,1], index: 4, kind: input, shape index: {}]
  %s5 = inlined_call_operand.vmem [shape: f32[8,128], index: 5, kind: output, shape index: {}]
  %s6 = sld [smem:[#allocation0]]
  $region30: #{forecast_model_forward.1} parent=0
    _
  %s8 = ssub.s32 1, %s6
  %s9 = scalar_select 0, %s8, %s6
  %10 = sst [smem:[#allocation2]] %s4
  // Predicated region
  $region2: #{forecast_model_forward.1} parent=0 // pred_check
    _
  $region3: #{forecast_model_forward.1} parent=0 // pred_check_branch
    %12 = sbr.rel (0) target = $region5
  $region4: #{forecast_model_forward.1} parent=0 // pred_region
    _
  $region5: #{forecast_model_forward.1} parent=0 // pred_fallthru
    _
  // Predicated region
  $region6: #{forecast_model_forward.1} parent=0 // pred_check
    _
  $region7: #{forecast_model_forward.1} parent=0 // pred_check_branch
    %14 = sbr.rel (0) target = $region9
  $region8: #{forecast_model_forward.1} parent=0 // pred_region
    _
  $region9: #{forecast_model_forward.1} parent=0 // pred_fallthru
    _
  // Predicated region
  $region10: #{forecast_model_forward.1} parent=0 // pred_check
    _
  $region11: #{forecast_model_forward.1} parent=0 // pred_check_branch
    %16 = sbr.rel (0) target = $region13
  $region12: #{forecast_model_forward.1} parent=0 // pred_region
    _
  $region13: #{forecast_model_forward.1} parent=0 // pred_fallthru
    _
  // Predicated region
  $region14: #{forecast_model_forward.1} parent=0 // pred_check
    _
  $region15: #{forecast_model_forward.1} parent=0 // pred_check_branch
    %18 = sbr.rel (0) target = $region17
  $region16: #{forecast_model_forward.1} parent=0 // pred_region
    _
  $region17: #{forecast_model_forward.1} parent=0 // pred_fallthru
    _
  // Predicated region
  $region18: #{forecast_model_forward.1} parent=0 // pred_check
    _
  $region19: #{forecast_model_forward.1} parent=0 // pred_check_branch
    %20 = sbr.rel (0) target = $region21
  $region20: #{forecast_model_forward.1} parent=0 // pred_region
    _
  $region21: #{forecast_model_forward.1} parent=0 // pred_fallthru
    _
  %v21 = vld [vmem:[%s0] sm:$0xff]
  %v22 = vld [vmem:[%s0 + $0x8] sm:$0xff]
  %v23 = vld [vmem:[%s0 + $0x10] sm:$0xff]
  %v24 = vld [vmem:[%s0 + $0x18] sm:$0xff]
  %v25 = vld [vmem:[%s1] sm:$0xff]
  %v26 = vld [vmem:[%s1 + $0x8] sm:$0xff]
  %v27 = vld [vmem:[%s1 + $0x10] sm:$0xff]
  %v28 = vld [vmem:[%s1 + $0x18] sm:$0xff]
  %v29 = vld [vmem:[%s1 + $0x20] sm:$0xff]
  %v30 = vld [vmem:[%s1 + $0x28] sm:$0xff]
  %v31 = vld [vmem:[%s1 + $0x30] sm:$0xff]
  %v32 = vld [vmem:[%s1 + $0x38] sm:$0xff]
  %v33 = vld [vmem:[%s2] sm:$0xff]
  %v34 = vld [vmem:[%s2 + $0x8] sm:$0xff]
  %v35 = vld [vmem:[%s2 + $0x10] sm:$0xff]
  %v36 = vld [vmem:[%s2 + $0x18] sm:$0xff]
  %v37 = vld [vmem:[%s2 + $0x20] sm:$0xff]
  %v38 = vld [vmem:[%s2 + $0x28] sm:$0xff]
  %v39 = vld [vmem:[%s2 + $0x30] sm:$0xff]
  %v40 = vld [vmem:[%s2 + $0x38] sm:$0xff]
  %42 = vset.pattern.permute.xlu0 0
  %43 = vperm.xlu0 %42, %v33
  %v44 = vpop.permute.xlu0 %43
  %47 = vset.pattern.permute.xlu0 0
  %48 = vperm.xlu0 %47, %v34
  %v49 = vpop.permute.xlu0 %48
  %52 = vset.pattern.permute.xlu0 0
  %53 = vperm.xlu0 %52, %v35
  %v54 = vpop.permute.xlu0 %53
  %57 = vset.pattern.permute.xlu0 0
  %58 = vperm.xlu0 %57, %v36
  %v59 = vpop.permute.xlu0 %58
  %62 = vset.pattern.permute.xlu0 0
  %63 = vperm.xlu0 %62, %v37
  %v64 = vpop.permute.xlu0 %63
  %67 = vset.pattern.permute.xlu0 0
  %68 = vperm.xlu0 %67, %v38
  %v69 = vpop.permute.xlu0 %68
  %72 = vset.pattern.permute.xlu0 0
  %73 = vperm.xlu0 %72, %v39
  %v74 = vpop.permute.xlu0 %73
  %77 = vset.pattern.permute.xlu0 0
  %78 = vperm.xlu0 %77, %v40
  %v79 = vpop.permute.xlu0 %78
  %vm81 = vcmask 261120
  %v83 = vsel %vm81, %v25, 0
  %v86 = vsel %vm81, %v26, 0
  %v89 = vsel %vm81, %v27, 0
  %v92 = vsel %vm81, %v28, 0
  %v95 = vsel %vm81, %v29, 0
  %v98 = vsel %vm81, %v30, 0
  %v101 = vsel %vm81, %v31, 0
  %v104 = vsel %vm81, %v32, 0
  %106 = vmatpush.msra.mxu0 0.0
  %107 = vmatpush.msra.mxu0 0.0
  %108 = vmatpush.msra.mxu0 0.0
  %109 = vmatpush.msra.mxu0 0.0
  %110 = vmatpush.msra.mxu0 0.0
  %111 = vmatpush.msra.mxu0 0.0
  %112 = vmatpush.msra.mxu0 0.0
  %113 = vmatpush.msra.mxu0 0.0
  %114 = vmatpush.msra.mxu0 0.0
  %115 = vmatpush.msra.mxu0 0.0
  %116 = vmatpush.msra.mxu0 0.0
  %117 = vmatpush.msra.mxu0 0.0
  %118 = vmatpush.msra.mxu0 %v24
  %119 = vmatpush.msra.mxu0 %v23
  %120 = vmatpush.msra.mxu0 %v22
  %121 = vmatpush.msra.mxu0 %v21
  %122 = vmatmul.f32.gmra.mxu0 %v83
  %v123 = vpop.f32.mrf.mxu0
  %v124 = vadd.f32 %v44, %v123
  %125 = vmatmul.f32.gmra.mxu0 %v86
  %v126 = vpop.f32.mrf.mxu0
  %v127 = vadd.f32 %v49, %v126
  %128 = vmatmul.f32.gmra.mxu0 %v89
  %v129 = vpop.f32.mrf.mxu0
  %v130 = vadd.f32 %v54, %v129
  %131 = vmatmul.f32.gmra.mxu0 %v92
  %v132 = vpop.f32.mrf.mxu0
  %v133 = vadd.f32 %v59, %v132
  %134 = vmatmul.f32.gmra.mxu0 %v95
  %v135 = vpop.f32.mrf.mxu0
  %v136 = vadd.f32 %v64, %v135
  %137 = vmatmul.f32.gmra.mxu0 %v98
  %v138 = vpop.f32.mrf.mxu0
  %v139 = vadd.f32 %v69, %v138
  %140 = vmatmul.f32.gmra.mxu0 %v101
  %v141 = vpop.f32.mrf.mxu0
  %v142 = vadd.f32 %v74, %v141
  %143 = vmatmul.f32.gmra.mxu0 %v104
  %v144 = vpop.f32.mrf.mxu0
  %v145 = vadd.f32 %v79, %v144
  %146 = vdwg.mxu0
  %v147 = vmax.f32 %v124, 0.0
  %v148 = vmax.f32 %v127, 0.0
  %v149 = vmax.f32 %v130, 0.0
  %v150 = vmax.f32 %v133, 0.0
  %v151 = vmax.f32 %v136, 0.0
  %v152 = vmax.f32 %v139, 0.0
  %v153 = vmax.f32 %v142, 0.0
  %v154 = vmax.f32 %v145, 0.0
  %v155 = vld [vmem:[%s3] sm:$0xff]
  %s156 = sld [smem:[#allocation2]]
  %v157 = vstv %s156
  %vm158 = vcmask 523264
  %v160 = vsel %vm158, %v155, 0
  %162 = vmatpush.msra.mxu0 0.0
  %163 = vmatpush.msra.mxu0 0.0
  %164 = vmatpush.msra.mxu0 0.0
  %165 = vmatpush.msra.mxu0 0.0
  %166 = vmatpush.msra.mxu0 0.0
  %167 = vmatpush.msra.mxu0 0.0
  %168 = vmatpush.msra.mxu0 0.0
  %169 = vmatpush.msra.mxu0 0.0
  %170 = vmatpush.msra.mxu0 %v154
  %171 = vmatpush.msra.mxu0 %v153
  %172 = vmatpush.msra.mxu0 %v152
  %173 = vmatpush.msra.mxu0 %v151
  %174 = vmatpush.msra.mxu0 %v150
  %175 = vmatpush.msra.mxu0 %v149
  %176 = vmatpush.msra.mxu0 %v148
  %177 = vmatpush.msra.mxu0 %v147
  %178 = vmatmul.f32.gmra.mxu0 %v160
  %v179 = vpop.f32.mrf.mxu0
  %v180 = vadd.f32 %v157, %v179
  %181 = vdwg.mxu0
  %182 = vst [vmem:[%s5] sm:$0xff] %v180
  // Predicated region
  $region22: #{forecast_model_forward.1} parent=0 // pred_check
    _
  $region23: #{forecast_model_forward.1} parent=0 // pred_check_branch
    %184 = sbr.rel (0) target = $region25
  $region24: #{forecast_model_forward.1} parent=0 // pred_region
    _
  $region25: #{forecast_model_forward.1} parent=0 // pred_fallthru
    _
  // Predicated region
  $region26: #{forecast_model_forward.1} parent=0 // pred_check
    _
  $region27: #{forecast_model_forward.1} parent=0 // pred_check_branch
    %186 = sbr.rel (0) target = $region29
  $region28: #{forecast_model_forward.1} parent=0 // pred_region
    _
  $region29: #{forecast_model_forward.1} parent=0 // pred_fallthru
    _

</llo_original>
